<compile_context>
chip_gen: v7x
topology: tpu7x:2x2x1
jax: 0.10.0
libtpu: 0.0.40
codegen_flags: <defaults>
</compile_context>

<pallas_src>
import functools
import math

import jax
import jax.numpy as jnp
from jax.experimental import pallas as pl
from jax.experimental.pallas import tpu as pltpu

LANE = 128      # last-dim tiles padded to multiples of this (vreg lane width)
SUBLANE = 8     # f32 sublane height (second-minor alignment)
MIB = 1024 * 1024


def _round_up(x, m):
    return ((x + m - 1) // m) * m


def _cdiv(a, b):
    return (a + b - 1) // b


def _vmem_capacity_bytes():
    """Per-core physical VMEM (v5e/v6e: 128 MiB, v7x: 64 MiB); conservative fallback."""
    try:
        return int(pltpu.get_tpu_info().vmem_capacity_bytes)
    except Exception:
        return 64 * MIB


# --------------------------------------------------------------------------- #
# Kernel
# --------------------------------------------------------------------------- #
def mlp_kernel(x_ref, w1_ref, b1_ref, w2_ref, b2_ref, w3_ref, b3_ref, o_ref):
    """Fused 3-layer MLP on one (TB, F_in) batch tile.

    x streams in its stored dtype (f32) and is cast to the weight dtype on the
    VPU; matmuls run on the MXU with f32 accumulation; bias adds stay f32.
    Weights/biases map to the same block at every grid step, so they remain
    VMEM-resident while batch tiles stream through the pipeline.
    """
    wdt = w1_ref.dtype
    x = x_ref[...].astype(wdt)
    h1 = jnp.dot(x, w1_ref[...], preferred_element_type=jnp.float32) + b1_ref[...]
    h2 = jnp.dot(h1.astype(wdt), w2_ref[...],
                 preferred_element_type=jnp.float32) + b2_ref[...]
    h3 = jnp.dot(h2.astype(wdt), w3_ref[...],
                 preferred_element_type=jnp.float32) + b3_ref[...]
    o_ref[...] = h3.astype(o_ref.dtype)


# --------------------------------------------------------------------------- #
# Parameter pre-packing (done once, outside the per-call forward)
# --------------------------------------------------------------------------- #
def prepack_params(params, weight_dtype=jnp.bfloat16):
    """Pad weights/biases to lane multiples and cast weights once.

    weight_dtype=jnp.float32 gives an f32-MXU fallback if bit-closeness to the
    PyTorch reference matters more than throughput.
    """
    w1, b1 = params["w1"], params["b1"]
    w2, b2 = params["w2"], params["b2"]
    w3, b3 = params["w3"], params["b3"]
    f_in, hidden = w1.shape
    f_out = w3.shape[1]
    f_in_p = _round_up(f_in, LANE)
    hid_p = _round_up(hidden, LANE)
    f_out_p = _round_up(f_out, LANE)

    def pad2(a, rows, cols):
        return jnp.pad(a, ((0, rows - a.shape[0]), (0, cols - a.shape[1])))

    # TODO(synk): int8 weight path (per-channel scales) for v5e/v6e MXU; v7x has
    # no integer MXU modes (fp8 only), so it is not drop-in there.
    packed = {
        "w1": pad2(w1, f_in_p, hid_p).astype(weight_dtype),
        "w2": pad2(w2, hid_p, hid_p).astype(weight_dtype),
        "w3": pad2(w3, hid_p, f_out_p).astype(weight_dtype),
        "b1": pad2(b1, 1, hid_p).astype(jnp.float32),
        "b2": pad2(b2, 1, hid_p).astype(jnp.float32),
        "b3": pad2(b3, 1, f_out_p).astype(jnp.float32),
    }
    dims = {"f_in": int(f_in), "hidden": int(hidden), "f_out": int(f_out)}
    return packed, dims


# --------------------------------------------------------------------------- #
# Forward
# --------------------------------------------------------------------------- #
def _pick_batch_tile(batch, max_tile):
    rows = _round_up(max(batch, SUBLANE), SUBLANE)
    # Target >= 2 grid steps when there is enough work (v7x megacore sharding);
    # tile sized from the actual batch so pad waste stays < 1 sublane tile.
    n_tiles = max(_cdiv(rows, max_tile), 2 if rows >= 2 * SUBLANE else 1)
    tb = _round_up(_cdiv(rows, n_tiles), SUBLANE)
    n_tiles = _cdiv(rows, tb)
    return tb, tb * n_tiles, n_tiles


def _mlp_pallas_call(xp, packed, *, tb, n_tiles, out_dtype,
                     single_buffer_weights, vmem_capacity):
    batch_p, f_in_p = xp.shape
    hid_p = packed["w1"].shape[1]
    f_out_p = packed["w3"].shape[1]
    w_item = jnp.dtype(packed["w1"].dtype).itemsize
    x_item = jnp.dtype(xp.dtype).itemsize
    o_item = jnp.dtype(out_dtype).itemsize

    # ---- VMEM footprint estimate (weights counted once when Buffered(1)). ---
    weight_bytes = w_item * (f_in_p * hid_p + hid_p * hid_p + hid_p * f_out_p)
    bias_bytes = 4 * (2 * hid_p + f_out_p)
    wb_mult = 1 if single_buffer_weights else 2
    stream_bytes = 2 * tb * (x_item * f_in_p + o_item * f_out_p)   # dbl-buffered x/out
    temp_bytes = tb * ((4 + w_item) * (2 * hid_p) + 4 * f_out_p + w_item * f_in_p)
    vmem_bytes = wb_mult * (weight_bytes + bias_bytes) + stream_bytes + temp_bytes

    # Generation-aware cap: leave 12-16 MiB headroom for Mosaic scratch/spill.
    headroom = max(12 * MIB, vmem_capacity // 8)
    cap = max(vmem_capacity - headroom, 16 * MIB)
    vmem_limit = int(min(cap, max(vmem_bytes * 3 // 2, 32 * MIB)))

    if single_buffer_weights:
        def resident(shape):
            # Constant-index blocks are never re-DMA'd after step 0; a single
            # VMEM copy halves resident-weight footprint vs default Buffered(2).
            return pl.BlockSpec(shape, lambda i: (0, 0),
                                pipeline_mode=pl.Buffered(1))
    else:
        def resident(shape):
            return pl.BlockSpec(shape, lambda i: (0, 0))

    flops = 2 * batch_p * (f_in_p * hid_p + hid_p * hid_p + hid_p * f_out_p)
    bytes_accessed = (x_item * batch_p * f_in_p + o_item * batch_p * f_out_p
                      + weight_bytes + bias_bytes)
    cost = pl.CostEstimate(flops=flops, transcendentals=0,
                           bytes_accessed=bytes_accessed)

    return pl.pallas_call(
        mlp_kernel,
        out_shape=jax.ShapeDtypeStruct((batch_p, f_out_p), out_dtype),
        grid=(n_tiles,),
        in_specs=[
            pl.BlockSpec((tb, f_in_p), lambda i: (i, 0)),        # streamed batch tile
            resident((f_in_p, hid_p)), resident((1, hid_p)),     # layer 1 (resident)
            resident((hid_p, hid_p)), resident((1, hid_p)),      # layer 2 (resident)
            resident((hid_p, f_out_p)), resident((1, f_out_p)),  # layer 3 (resident)
        ],
        out_specs=pl.BlockSpec((tb, f_out_p), lambda i: (i, 0)),
        compiler_params=pltpu.CompilerParams(
            dimension_semantics=("parallel",),
            vmem_limit_bytes=vmem_limit),
        cost_estimate=cost,
    )(xp, packed["w1"], packed["b1"], packed["w2"], packed["b2"],
      packed["w3"], packed["b3"])


def blob_model_forward(x, packed, dims, out_dtype=jnp.float32):
    """x: (batch, input_features) f32.  packed/dims: from prepack_params."""
    batch, f_in = x.shape
    assert f_in == dims["f_in"], "x feature dim does not match packed params"
    f_in_p = packed["w1"].shape[0]
    f_out = dims["f_out"]

    vmem_capacity = _vmem_capacity_bytes()
    # v5e/v6e (128 MiB VMEM) can afford bigger batch tiles; keep v7x at 512.
    max_tile = 1024 if vmem_capacity >= 96 * MIB else 512
    tb, batch_p, n_tiles = _pick_batch_tile(batch, max_tile)

    # x stays f32 (bf16 cast happens in-kernel); pad only when actually needed
    # so aligned inputs incur no extra wrapper HBM pass.
    xp = x
    if (batch_p, f_in_p) != x.shape:
        xp = jnp.pad(x, ((0, batch_p - batch), (0, f_in_p - f_in)))

    call = functools.partial(
        _mlp_pallas_call, xp, packed, tb=tb, n_tiles=n_tiles,
        out_dtype=out_dtype, vmem_capacity=vmem_capacity)
    try:
        out_p = call(single_buffer_weights=True)
    except Exception:
        # Fallback for runtimes without Buffered(1) support on grid-invariant
        # specs: default double-buffering (2x resident-weight VMEM).
        out_p = call(single_buffer_weights=False)

    # TODO(synk): once resident bf16 weights exceed ~24-32 MiB (hidden >~ 4k),
    # add a K-tiled grid axis (marked "arbitrary", placed last) with a VMEM f32
    # accumulator and pl.when init/finalize instead of keeping w2 fully resident.
    return out_p[:batch, :f_out]


# --------------------------------------------------------------------------- #
# PyTorch-style init (U(-1/sqrt(fan_in), 1/sqrt(fan_in)), f32)
# --------------------------------------------------------------------------- #
def init_params(key, input_features, output_features, hidden_units):
    def linear(k, fan_in, fan_out):
        kw, kb = jax.random.split(k)
        bound = 1.0 / math.sqrt(fan_in)
        w = jax.random.uniform(kw, (fan_in, fan_out), jnp.float32, -bound, bound)
        b = jax.random.uniform(kb, (1, fan_out), jnp.float32, -bound, bound)
        return w, b

    k1, k2, k3 = jax.random.split(key, 3)
    w1, b1 = linear(k1, input_features, hidden_units)
    w2, b2 = linear(k2, hidden_units, hidden_units)
    w3, b3 = linear(k3, hidden_units, output_features)
    return {"w1": w1, "b1": b1, "w2": w2, "b2": b2, "w3": w3, "b3": b3}


if __name__ == "__main__":
    # Small shapes consistent with the multi-class "blob" example.
    batch = 8
    input_features = 2
    output_features = 4
    hidden_units = 8

    key = jax.random.PRNGKey(0)
    kx, kp = jax.random.split(key)

    x = jax.random.normal(kx, (batch, input_features), jnp.float32)
    params = init_params(kp, input_features, output_features, hidden_units)
    packed, dims = prepack_params(params)        # pad + bf16-cast weights ONCE

    out = jax.block_until_ready(blob_model_forward(x, packed, dims))
    assert out.shape == (batch, output_features)

    # Reference with matching bf16-matmul / f32-accumulate semantics.
    bf = jnp.bfloat16
    ref = jnp.dot(x.astype(bf), params["w1"].astype(bf),
                  preferred_element_type=jnp.float32) + params["b1"]
    ref = jnp.dot(ref.astype(bf), params["w2"].astype(bf),
                  preferred_element_type=jnp.float32) + params["b2"]
    ref = jnp.dot(ref.astype(bf), params["w3"].astype(bf),
                  preferred_element_type=jnp.float32) + params["b3"]
    assert jnp.allclose(out, ref, atol=2e-3, rtol=2e-3), \
        float(jnp.max(jnp.abs(out - ref)))

    # Sanity vs full-f32 PyTorch Linear semantics (loose tol: matmuls run bf16).
    ref32 = x @ params["w1"] + params["b1"]
    ref32 = ref32 @ params["w2"] + params["b2"]
    ref32 = ref32 @ params["w3"] + params["b3"]
    assert jnp.allclose(out, ref32, atol=5e-2, rtol=5e-2)

    print("KERNEL_OK")
</pallas_src>

<mosaic_0001>
module attributes {stable_mosaic.version = 11 : i64} {
  func.func @mlp_kernel(%arg0: i32, %arg1: memref<8x128xf32, #tpu.memory_space<vmem>>, %arg2: memref<128x128xbf16, #tpu.memory_space<vmem>>, %arg3: memref<1x128xf32, #tpu.memory_space<vmem>>, %arg4: memref<128x128xbf16, #tpu.memory_space<vmem>>, %arg5: memref<1x128xf32, #tpu.memory_space<vmem>>, %arg6: memref<128x128xbf16, #tpu.memory_space<vmem>>, %arg7: memref<1x128xf32, #tpu.memory_space<vmem>>, %arg8: memref<8x128xf32, #tpu.memory_space<vmem>>) attributes {dimension_semantics = [#tpu.dimension_semantics<parallel>], iteration_bounds = array<i64: 1>, scalar_prefetch = 0 : i64, scratch_operands = 0 : i64, tpu.core_type = #tpu.core_type<tc>, window_params = [{transform_indices = @transform_0, window_bounds = array<i64: 8, 128>}, {pipeline_mode = #tpu.pipeline_mode<synchronous>, transform_indices = @transform_1, window_bounds = array<i64: 128, 128>}, {pipeline_mode = #tpu.pipeline_mode<synchronous>, transform_indices = @transform_2, window_bounds = array<i64: 1, 128>}, {pipeline_mode = #tpu.pipeline_mode<synchronous>, transform_indices = @transform_3, window_bounds = array<i64: 128, 128>}, {pipeline_mode = #tpu.pipeline_mode<synchronous>, transform_indices = @transform_4, window_bounds = array<i64: 1, 128>}, {pipeline_mode = #tpu.pipeline_mode<synchronous>, transform_indices = @transform_5, window_bounds = array<i64: 128, 128>}, {pipeline_mode = #tpu.pipeline_mode<synchronous>, transform_indices = @transform_6, window_bounds = array<i64: 1, 128>}, {transform_indices = @transform_7, window_bounds = array<i64: 8, 128>}]} {
    %c0 = arith.constant 0 : index
    %c0_0 = arith.constant 0 : index
    %0 = vector.load %arg1[%c0, %c0_0] : memref<8x128xf32, #tpu.memory_space<vmem>>, vector<8x128xf32>
    %1 = arith.truncf %0 : vector<8x128xf32> to vector<8x128xbf16>
    %c0_1 = arith.constant 0 : index
    %c0_2 = arith.constant 0 : index
    %2 = vector.load %arg2[%c0_1, %c0_2] : memref<128x128xbf16, #tpu.memory_space<vmem>>, vector<128x128xbf16>
    %cst = arith.constant dense<0.000000e+00> : vector<8x128xf32>
    %3 = tpu.matmul %1, %2, %cst {dimension_numbers = #tpu.dot_dimension_numbers<[1], [0], [0], [1], [0, 0, 1, 1], [], []>} : vector<8x128xbf16>, vector<128x128xbf16>, vector<8x128xf32> -> vector<8x128xf32>
    %c0_3 = arith.constant 0 : index
    %c0_4 = arith.constant 0 : index
    %4 = vector.load %arg3[%c0_3, %c0_4] : memref<1x128xf32, #tpu.memory_space<vmem>>, vector<1x128xf32>
    %5 = vector.broadcast %4 : vector<1x128xf32> to vector<8x128xf32>
    %6 = arith.addf %3, %5 : vector<8x128xf32>
    %7 = arith.truncf %6 : vector<8x128xf32> to vector<8x128xbf16>
    %c0_5 = arith.constant 0 : index
    %c0_6 = arith.constant 0 : index
    %8 = vector.load %arg4[%c0_5, %c0_6] : memref<128x128xbf16, #tpu.memory_space<vmem>>, vector<128x128xbf16>
    %cst_7 = arith.constant dense<0.000000e+00> : vector<8x128xf32>
    %9 = tpu.matmul %7, %8, %cst_7 {dimension_numbers = #tpu.dot_dimension_numbers<[1], [0], [0], [1], [0, 0, 1, 1], [], []>} : vector<8x128xbf16>, vector<128x128xbf16>, vector<8x128xf32> -> vector<8x128xf32>
    %c0_8 = arith.constant 0 : index
    %c0_9 = arith.constant 0 : index
    %10 = vector.load %arg5[%c0_8, %c0_9] : memref<1x128xf32, #tpu.memory_space<vmem>>, vector<1x128xf32>
    %11 = vector.broadcast %10 : vector<1x128xf32> to vector<8x128xf32>
    %12 = arith.addf %9, %11 : vector<8x128xf32>
    %13 = arith.truncf %12 : vector<8x128xf32> to vector<8x128xbf16>
    %c0_10 = arith.constant 0 : index
    %c0_11 = arith.constant 0 : index
    %14 = vector.load %arg6[%c0_10, %c0_11] : memref<128x128xbf16, #tpu.memory_space<vmem>>, vector<128x128xbf16>
    %cst_12 = arith.constant dense<0.000000e+00> : vector<8x128xf32>
    %15 = tpu.matmul %13, %14, %cst_12 {dimension_numbers = #tpu.dot_dimension_numbers<[1], [0], [0], [1], [0, 0, 1, 1], [], []>} : vector<8x128xbf16>, vector<128x128xbf16>, vector<8x128xf32> -> vector<8x128xf32>
    %c0_13 = arith.constant 0 : index
    %c0_14 = arith.constant 0 : index
    %16 = vector.load %arg7[%c0_13, %c0_14] : memref<1x128xf32, #tpu.memory_space<vmem>>, vector<1x128xf32>
    %17 = vector.broadcast %16 : vector<1x128xf32> to vector<8x128xf32>
    %18 = arith.addf %15, %17 : vector<8x128xf32>
    %c0_15 = arith.constant 0 : index
    %c0_16 = arith.constant 0 : index
    %19 = vector.load %arg8[%c0_15, %c0_16] : memref<8x128xf32, #tpu.memory_space<vmem>>, vector<8x128xf32>
    tpu.vector_store %arg8[%c0_15, %c0_16], %18 {strides = array<i32>} : memref<8x128xf32, #tpu.memory_space<vmem>>, vector<8x128xf32>,
    return
  }
  func.func @transform_0(%arg0: i32) -> (i32, i32) {
    %c0_i32 = arith.constant 0 : i32
    %c0_i32_0 = arith.constant 0 : i32
    return %arg0, %c0_i32 : i32, i32
  }
  func.func @transform_1(%arg0: i32) -> (i32, i32) {
    %c0_i32 = arith.constant 0 : i32
    %c0_i32_0 = arith.constant 0 : i32
    %c0_i32_1 = arith.constant 0 : i32
    return %c0_i32, %c0_i32_0 : i32, i32
  }
  func.func @transform_2(%arg0: i32) -> (i32, i32) {
    %c0_i32 = arith.constant 0 : i32
    %c0_i32_0 = arith.constant 0 : i32
    %c0_i32_1 = arith.constant 0 : i32
    return %c0_i32, %c0_i32_0 : i32, i32
  }
  func.func @transform_3(%arg0: i32) -> (i32, i32) {
    %c0_i32 = arith.constant 0 : i32
    %c0_i32_0 = arith.constant 0 : i32
    %c0_i32_1 = arith.constant 0 : i32
    return %c0_i32, %c0_i32_0 : i32, i32
  }
  func.func @transform_4(%arg0: i32) -> (i32, i32) {
    %c0_i32 = arith.constant 0 : i32
    %c0_i32_0 = arith.constant 0 : i32
    %c0_i32_1 = arith.constant 0 : i32
    return %c0_i32, %c0_i32_0 : i32, i32
  }
  func.func @transform_5(%arg0: i32) -> (i32, i32) {
    %c0_i32 = arith.constant 0 : i32
    %c0_i32_0 = arith.constant 0 : i32
    %c0_i32_1 = arith.constant 0 : i32
    return %c0_i32, %c0_i32_0 : i32, i32
  }
  func.func @transform_6(%arg0: i32) -> (i32, i32) {
    %c0_i32 = arith.constant 0 : i32
    %c0_i32_0 = arith.constant 0 : i32
    %c0_i32_1 = arith.constant 0 : i32
    return %c0_i32, %c0_i32_0 : i32, i32
  }
  func.func @transform_7(%arg0: i32) -> (i32, i32) {
    %c0_i32 = arith.constant 0 : i32
    %c0_i32_0 = arith.constant 0 : i32
    return %arg0, %c0_i32 : i32, i32
  }
}

module attributes {stable_mosaic.version = 11 : i64} {
  func.func @mlp_kernel(%arg0: i32, %arg1: memref<8x128xf32, #tpu.memory_space<vmem>>, %arg2: memref<128x128xbf16, #tpu.memory_space<vmem>>, %arg3: memref<1x128xf32, #tpu.memory_space<vmem>>, %arg4: memref<128x128xbf16, #tpu.memory_space<vmem>>, %arg5: memref<1x128xf32, #tpu.memory_space<vmem>>, %arg6: memref<128x128xbf16, #tpu.memory_space<vmem>>, %arg7: memref<1x128xf32, #tpu.memory_space<vmem>>, %arg8: memref<8x128xf32, #tpu.memory_space<vmem>>) attributes {dimension_semantics = [#tpu.dimension_semantics<parallel>], iteration_bounds = array<i64: 1>, scalar_prefetch = 0 : i64, scratch_operands = 0 : i64, tpu.core_type = #tpu.core_type<tc>, window_params = [{transform_indices = @transform_0, window_bounds = array<i64: 8, 128>}, {pipeline_mode = #tpu.pipeline_mode<synchronous>, transform_indices = @transform_1, window_bounds = array<i64: 128, 128>}, {pipeline_mode = #tpu.pipeline_mode<synchronous>, transform_indices = @transform_2, window_bounds = array<i64: 1, 128>}, {pipeline_mode = #tpu.pipeline_mode<synchronous>, transform_indices = @transform_3, window_bounds = array<i64: 128, 128>}, {pipeline_mode = #tpu.pipeline_mode<synchronous>, transform_indices = @transform_4, window_bounds = array<i64: 1, 128>}, {pipeline_mode = #tpu.pipeline_mode<synchronous>, transform_indices = @transform_5, window_bounds = array<i64: 128, 128>}, {pipeline_mode = #tpu.pipeline_mode<synchronous>, transform_indices = @transform_6, window_bounds = array<i64: 1, 128>}, {transform_indices = @transform_7, window_bounds = array<i64: 8, 128>}]} {
    %c0 = arith.constant 0 : index
    %c0_0 = arith.constant 0 : index
    %0 = vector.load %arg1[%c0, %c0_0] : memref<8x128xf32, #tpu.memory_space<vmem>>, vector<8x128xf32>
    %1 = arith.truncf %0 : vector<8x128xf32> to vector<8x128xbf16>
    %c0_1 = arith.constant 0 : index
    %c0_2 = arith.constant 0 : index
    %2 = vector.load %arg2[%c0_1, %c0_2] : memref<128x128xbf16, #tpu.memory_space<vmem>>, vector<128x128xbf16>
    %cst = arith.constant dense<0.000000e+00> : vector<8x128xf32>
    %3 = tpu.matmul %1, %2, %cst {dimension_numbers = #tpu.dot_dimension_numbers<[1], [0], [0], [1], [0, 0, 1, 1], [], []>} : vector<8x128xbf16>, vector<128x128xbf16>, vector<8x128xf32> -> vector<8x128xf32>
    %c0_3 = arith.constant 0 : index
    %c0_4 = arith.constant 0 : index
    %4 = vector.load %arg3[%c0_3, %c0_4] : memref<1x128xf32, #tpu.memory_space<vmem>>, vector<1x128xf32>
    %5 = vector.broadcast %4 : vector<1x128xf32> to vector<8x128xf32>
    %6 = arith.addf %3, %5 : vector<8x128xf32>
    %7 = arith.truncf %6 : vector<8x128xf32> to vector<8x128xbf16>
    %c0_5 = arith.constant 0 : index
    %c0_6 = arith.constant 0 : index
    %8 = vector.load %arg4[%c0_5, %c0_6] : memref<128x128xbf16, #tpu.memory_space<vmem>>, vector<128x128xbf16>
    %cst_7 = arith.constant dense<0.000000e+00> : vector<8x128xf32>
    %9 = tpu.matmul %7, %8, %cst_7 {dimension_numbers = #tpu.dot_dimension_numbers<[1], [0], [0], [1], [0, 0, 1, 1], [], []>} : vector<8x128xbf16>, vector<128x128xbf16>, vector<8x128xf32> -> vector<8x128xf32>
    %c0_8 = arith.constant 0 : index
    %c0_9 = arith.constant 0 : index
    %10 = vector.load %arg5[%c0_8, %c0_9] : memref<1x128xf32, #tpu.memory_space<vmem>>, vector<1x128xf32>
    %11 = vector.broadcast %10 : vector<1x128xf32> to vector<8x128xf32>
    %12 = arith.addf %9, %11 : vector<8x128xf32>
    %13 = arith.truncf %12 : vector<8x128xf32> to vector<8x128xbf16>
    %c0_10 = arith.constant 0 : index
    %c0_11 = arith.constant 0 : index
    %14 = vector.load %arg6[%c0_10, %c0_11] : memref<128x128xbf16, #tpu.memory_space<vmem>>, vector<128x128xbf16>
    %cst_12 = arith.constant dense<0.000000e+00> : vector<8x128xf32>
    %15 = tpu.matmul %13, %14, %cst_12 {dimension_numbers = #tpu.dot_dimension_numbers<[1], [0], [0], [1], [0, 0, 1, 1], [], []>} : vector<8x128xbf16>, vector<128x128xbf16>, vector<8x128xf32> -> vector<8x128xf32>
    %c0_13 = arith.constant 0 : index
    %c0_14 = arith.constant 0 : index
    %16 = vector.load %arg7[%c0_13, %c0_14] : memref<1x128xf32, #tpu.memory_space<vmem>>, vector<1x128xf32>
    %17 = vector.broadcast %16 : vector<1x128xf32> to vector<8x128xf32>
    %18 = arith.addf %15, %17 : vector<8x128xf32>
    %c0_15 = arith.constant 0 : index
    %c0_16 = arith.constant 0 : index
    %19 = vector.load %arg8[%c0_15, %c0_16] : memref<8x128xf32, #tpu.memory_space<vmem>>, vector<8x128xf32>
    tpu.vector_store %arg8[%c0_15, %c0_16], %18 {strides = array<i32>} : memref<8x128xf32, #tpu.memory_space<vmem>>, vector<8x128xf32>,
    return
  }
  func.func @transform_0(%arg0: i32) -> (i32, i32) {
    %c0_i32 = arith.constant 0 : i32
    %c0_i32_0 = arith.constant 0 : i32
    return %arg0, %c0_i32 : i32, i32
  }
  func.func @transform_1(%arg0: i32) -> (i32, i32) {
    %c0_i32 = arith.constant 0 : i32
    %c0_i32_0 = arith.constant 0 : i32
    %c0_i32_1 = arith.constant 0 : i32
    return %c0_i32, %c0_i32_0 : i32, i32
  }
  func.func @transform_2(%arg0: i32) -> (i32, i32) {
    %c0_i32 = arith.constant 0 : i32
    %c0_i32_0 = arith.constant 0 : i32
    %c0_i32_1 = arith.constant 0 : i32
    return %c0_i32, %c0_i32_0 : i32, i32
  }
  func.func @transform_3(%arg0: i32) -> (i32, i32) {
    %c0_i32 = arith.constant 0 : i32
    %c0_i32_0 = arith.constant 0 : i32
    %c0_i32_1 = arith.constant 0 : i32
    return %c0_i32, %c0_i32_0 : i32, i32
  }
  func.func @transform_4(%arg0: i32) -> (i32, i32) {
    %c0_i32 = arith.constant 0 : i32
    %c0_i32_0 = arith.constant 0 : i32
    %c0_i32_1 = arith.constant 0 : i32
    return %c0_i32, %c0_i32_0 : i32, i32
  }
  func.func @transform_5(%arg0: i32) -> (i32, i32) {
    %c0_i32 = arith.constant 0 : i32
    %c0_i32_0 = arith.constant 0 : i32
    %c0_i32_1 = arith.constant 0 : i32
    return %c0_i32, %c0_i32_0 : i32, i32
  }
  func.func @transform_6(%arg0: i32) -> (i32, i32) {
    %c0_i32 = arith.constant 0 : i32
    %c0_i32_0 = arith.constant 0 : i32
    %c0_i32_1 = arith.constant 0 : i32
    return %c0_i32, %c0_i32_0 : i32, i32
  }
  func.func @transform_7(%arg0: i32) -> (i32, i32) {
    %c0_i32 = arith.constant 0 : i32
    %c0_i32_0 = arith.constant 0 : i32
    return %arg0, %c0_i32 : i32, i32
  }
}

</mosaic_0001>

<llo_original>
// kernel: tpu_custom_call.1
$region0: #{tpu_custom_call.1}
  #allocation0 [shape = 'u32[]', space=smem, size = 0x4, offset = 0x4, fixed_abs, tag = 'smem constant byte address 0x4 - core index']
  #allocation1 [shape = 'u32[144,128]{1,0:T(1,128)}', space=vmem, size = 0x12000, scoped, tag = 'internal scratch']
  %s0 = inlined_call_operand.hbm [shape: f32[8,128], index: 0, kind: input, shape index: {}]
  %s1 = inlined_call_operand.hbm [shape: bf16[128,128], index: 1, kind: input, shape index: {}]
  %s2 = inlined_call_operand.vmem [shape: f32[1,128], index: 2, kind: input, shape index: {}]
  %s3 = inlined_call_operand.hbm [shape: bf16[128,128], index: 3, kind: input, shape index: {}]
  %s4 = inlined_call_operand.vmem [shape: f32[1,128], index: 4, kind: input, shape index: {}]
  %s5 = inlined_call_operand.hbm [shape: bf16[128,128], index: 5, kind: input, shape index: {}]
  %s6 = inlined_call_operand.vmem [shape: f32[1,128], index: 6, kind: input, shape index: {}]
  %s7 = inlined_call_operand.hbm [shape: f32[8,128], index: 7, kind: output, shape index: {}]
  %s8 = sld [smem:[#allocation0]]
  $region54: #{tpu_custom_call.1} parent=0
    _
  %s10 = ssub.s32 1, %s8
  %s11 = scalar_select 0, %s10, %s8
  $region1: #{tpu_custom_call.1} parent=0
    #allocation2 [shape = 'u8[4096]{0}', space=vmem, size = 0x1000, scoped, tag = 'input window, operand 0, single buffered']
    #allocation3 [shape = 's32[1]{0}', space=sflag, size = 0x4, scoped, tag = 'scoped memory for tpu_custom_call.1']
    #allocation4 [shape = 's32[1]{0}', space=sflag, size = 0x4, scoped, tag = 'scoped memory for tpu_custom_call.1']
    #allocation5 [shape = 'u8[32768]{0}', space=vmem, size = 0x8000, scoped, tag = 'input window, operand 1, single buffered']
    #allocation6 [shape = 's32[1]{0}', space=sflag, size = 0x4, scoped, tag = 'scoped memory for tpu_custom_call.1']
    #allocation7 [shape = 'u8[32768]{0}', space=vmem, size = 0x8000, scoped, tag = 'input window, operand 3, single buffered']
    #allocation8 [shape = 'u8[32768]{0}', space=vmem, size = 0x8000, scoped, tag = 'input window, operand 5, single buffered']
    #allocation9 [shape = 's32[1]{0}', space=sflag, size = 0x4, scoped, tag = 'scoped memory for tpu_custom_call.1']
    #allocation10 [shape = 'u8[4096]{0}', space=vmem, size = 0x1000, scoped, tag = 'output window, operand 0, single buffered']
    %12 = vsyncpa [#allocation3], 0
    %13 = vsyncpa [#allocation6], 0
    %14 = vsyncpa [#allocation9], 0
    %15 = vsyncpa [#allocation4], 0
    // Predicated region
    $region2: #{tpu_custom_call.1} parent=1 // pred_check
      _
    $region3: #{tpu_custom_call.1} parent=1 // pred_check_branch
      %17 = sbr.rel (0) target = $region5
    $region4: #{tpu_custom_call.1} parent=1 // pred_region
      %s19 = ssub.s32 128, 128
      %20 = vsyncadd [#allocation3], %s19
      %s22 = sshll.u32 [#allocation2], 4
      %s23 = int_to_ptr.vmem [resolvable:$true] %s22
      %25 = dma.hbm_to_vmem [thread:$0]  %s0, 128, %s23, [#allocation3]
    $region5: #{tpu_custom_call.1} parent=1 // pred_fallthru
      _
    // Predicated region
    $region6: #{tpu_custom_call.1} parent=1 // pred_check
      _
    $region7: #{tpu_custom_call.1} parent=1 // pred_check_branch
      %27 = sbr.rel (0) target = $region9
    $region8: #{tpu_custom_call.1} parent=1 // pred_region
      %s29 = ssub.s32 1024, 1024
      %30 = vsyncadd [#allocation6], %s29
      %s31 = sshll.u32 [#allocation5], 4
      %s32 = int_to_ptr.vmem [resolvable:$true] %s31
      %37 = dma.hbm_to_vmem [thread:$0]  %s1, 1024, %s32, [#allocation6], 64, 64, 4
    $region9: #{tpu_custom_call.1} parent=1 // pred_fallthru
      _
    // Predicated region
    $region10: #{tpu_custom_call.1} parent=1 // pred_check
      _
    $region11: #{tpu_custom_call.1} parent=1 // pred_check_branch
      %39 = sbr.rel (0) target = $region13
    $region12: #{tpu_custom_call.1} parent=1 // pred_region
      _
    $region13: #{tpu_custom_call.1} parent=1 // pred_fallthru
      _
    // Predicated region
    $region14: #{tpu_custom_call.1} parent=1 // pred_check
      _
    $region15: #{tpu_custom_call.1} parent=1 // pred_check_branch
      %41 = sbr.rel (0) target = $region17
    $region16: #{tpu_custom_call.1} parent=1 // pred_region
      %s43 = ssub.s32 1024, 1024
      %44 = vsyncadd [#allocation6], %s43
      %s45 = sshll.u32 [#allocation7], 4
      %s46 = int_to_ptr.vmem [resolvable:$true] %s45
      %51 = dma.hbm_to_vmem [thread:$0]  %s3, 1024, %s46, [#allocation6], 64, 64, 4
    $region17: #{tpu_custom_call.1} parent=1 // pred_fallthru
      _
    // Predicated region
    $region18: #{tpu_custom_call.1} parent=1 // pred_check
      _
    $region19: #{tpu_custom_call.1} parent=1 // pred_check_branch
      %53 = sbr.rel (0) target = $region21
    $region20: #{tpu_custom_call.1} parent=1 // pred_region
      _
    $region21: #{tpu_custom_call.1} parent=1 // pred_fallthru
      _
    // Predicated region
    $region22: #{tpu_custom_call.1} parent=1 // pred_check
      _
    $region23: #{tpu_custom_call.1} parent=1 // pred_check_branch
      %55 = sbr.rel (0) target = $region25
    $region24: #{tpu_custom_call.1} parent=1 // pred_region
      %s57 = ssub.s32 1024, 1024
      %58 = vsyncadd [#allocation9], %s57
      %s59 = sshll.u32 [#allocation8], 4
      %s60 = int_to_ptr.vmem [resolvable:$true] %s59
      %65 = dma.hbm_to_vmem [thread:$0]  %s5, 1024, %s60, [#allocation9], 64, 64, 4
    $region25: #{tpu_custom_call.1} parent=1 // pred_fallthru
      _
    // Predicated region
    $region26: #{tpu_custom_call.1} parent=1 // pred_check
      _
    $region27: #{tpu_custom_call.1} parent=1 // pred_check_branch
      %67 = sbr.rel (0) target = $region29
    $region28: #{tpu_custom_call.1} parent=1 // pred_region
      _
    $region29: #{tpu_custom_call.1} parent=1 // pred_fallthru
      _
    // Predicated region
    $region30: #{tpu_custom_call.1} parent=1 // pred_check
      _
    $region31: #{tpu_custom_call.1} parent=1 // pred_check_branch
      %69 = sbr.rel (0) target = $region33
    $region32: #{tpu_custom_call.1} parent=1 // pred_region
      %70 = dma.done [#allocation3], 128
    $region33: #{tpu_custom_call.1} parent=1 // pred_fallthru
      _
    // Predicated region
    $region34: #{tpu_custom_call.1} parent=1 // pred_check
      _
    $region35: #{tpu_custom_call.1} parent=1 // pred_check_branch
      %72 = sbr.rel (0) target = $region37
    $region36: #{tpu_custom_call.1} parent=1 // pred_region
      %73 = dma.done [#allocation6], 1024
    $region37: #{tpu_custom_call.1} parent=1 // pred_fallthru
      _
    // Predicated region
    $region38: #{tpu_custom_call.1} parent=1 // pred_check
      _
    $region39: #{tpu_custom_call.1} parent=1 // pred_check_branch
      %75 = sbr.rel (0) target = $region41
    $region40: #{tpu_custom_call.1} parent=1 // pred_region
      %76 = dma.done [#allocation6], 1024
    $region41: #{tpu_custom_call.1} parent=1 // pred_fallthru
      _
    // Predicated region
    $region42: #{tpu_custom_call.1} parent=1 // pred_check
      _
    $region43: #{tpu_custom_call.1} parent=1 // pred_check_branch
      %78 = sbr.rel (0) target = $region45
    $region44: #{tpu_custom_call.1} parent=1 // pred_region
      %79 = dma.done [#allocation9], 1024
    $region45: #{tpu_custom_call.1} parent=1 // pred_fallthru
      _
    %v81 = vld [vmem:[#allocation2] sm:$0xff]
    %v82 = vpack.c.bf16 %v81, %v81
    %v83 = vld [vmem:[#allocation5] sm:$0xf]
    %v84 = vld [vmem:[#allocation5 + $0x4] sm:$0xf]
    %v85 = vld [vmem:[#allocation5 + $0x8] sm:$0xf]
    %v86 = vld [vmem:[#allocation5 + $0xc] sm:$0xf]
    %v87 = vld [vmem:[#allocation5 + $0x10] sm:$0xf]
    %v88 = vld [vmem:[#allocation5 + $0x14] sm:$0xf]
    %v89 = vld [vmem:[#allocation5 + $0x18] sm:$0xf]
    %v90 = vld [vmem:[#allocation5 + $0x1c] sm:$0xf]
    %v91 = vld [vmem:[#allocation5 + $0x20] sm:$0xf]
    %v92 = vld [vmem:[#allocation5 + $0x24] sm:$0xf]
    %v93 = vld [vmem:[#allocation5 + $0x28] sm:$0xf]
    %v94 = vld [vmem:[#allocation5 + $0x2c] sm:$0xf]
    %v95 = vld [vmem:[#allocation5 + $0x30] sm:$0xf]
    %v96 = vld [vmem:[#allocation5 + $0x34] sm:$0xf]
    %v97 = vld [vmem:[#allocation5 + $0x38] sm:$0xf]
    %v98 = vld [vmem:[#allocation5 + $0x3c] sm:$0xf]
    %v99 = vld [vmem:[%s2] sm:$0x1]
    %v101 = vlaneseq
    %v102 = vshrl.u32 %v101, 7
    %v103 = vsub.s32 0, %v102
    %v104 = vrot.slane %v99, %v103
    %v122 = vunpack.c.l.b16 %v83
    %v123 = vunpack.c.l.b16 %v84
    %v124 = vunpack.c.l.b16 %v85
    %v125 = vunpack.c.l.b16 %v86
    %v126 = vunpack.c.l.b16 %v87
    %v127 = vunpack.c.l.b16 %v88
    %v128 = vunpack.c.l.b16 %v89
    %v129 = vunpack.c.l.b16 %v90
    %v130 = vunpack.c.l.b16 %v91
    %v131 = vunpack.c.l.b16 %v92
    %v132 = vunpack.c.l.b16 %v93
    %v133 = vunpack.c.l.b16 %v94
    %v134 = vunpack.c.l.b16 %v95
    %v135 = vunpack.c.l.b16 %v96
    %v136 = vunpack.c.l.b16 %v97
    %v137 = vunpack.c.l.b16 %v98
    %v138 = vpack.c.b16 %v123, %v122
    %v139 = vpack.c.b16 %v125, %v124
    %v140 = vpack.c.b16 %v127, %v126
    %v141 = vpack.c.b16 %v129, %v128
    %v142 = vpack.c.b16 %v131, %v130
    %v143 = vpack.c.b16 %v133, %v132
    %v144 = vpack.c.b16 %v135, %v134
    %v145 = vpack.c.b16 %v137, %v136
    %154 = vmatprep.subr.bf16.mxu0 0
    %155 = vmatpush1.bf16.msra.mxu0 %v138
    %156 = vmatprep.subr.bf16.mxu0 0
    %157 = vmatpush1.bf16.msra.mxu0 %v139
    %158 = vmatprep.subr.bf16.mxu0 0
    %159 = vmatpush1.bf16.msra.mxu0 %v140
    %160 = vmatprep.subr.bf16.mxu0 0
    %161 = vmatpush1.bf16.msra.mxu0 %v141
    %162 = vmatprep.subr.bf16.mxu0 0
    %163 = vmatpush1.bf16.msra.mxu0 %v142
    %164 = vmatprep.subr.bf16.mxu0 0
    %165 = vmatpush1.bf16.msra.mxu0 %v143
    %166 = vmatprep.subr.bf16.mxu0 0
    %167 = vmatpush1.bf16.msra.mxu0 %v144
    %168 = vmatprep.subr.bf16.mxu0 0
    %169 = vmatpush1.bf16.msra.mxu0 %v145
    %170 = vmatprep.subr.bf16.mxu0 0
    %171 = vmatpush1.bf16.msra.mxu0 0
    %172 = vmatprep.subr.bf16.mxu0 0
    %173 = vmatpush1.bf16.msra.mxu0 0
    %174 = vmatprep.subr.bf16.mxu0 0
    %175 = vmatpush1.bf16.msra.mxu0 0
    %176 = vmatprep.subr.bf16.mxu0 0
    %177 = vmatpush1.bf16.msra.mxu0 0
    %178 = vmatprep.subr.bf16.mxu0 0
    %179 = vmatpush1.bf16.msra.mxu0 0
    %180 = vmatprep.subr.bf16.mxu0 0
    %181 = vmatpush1.bf16.msra.mxu0 0
    %182 = vmatprep.subr.bf16.mxu0 0
    %183 = vmatpush1.bf16.msra.mxu0 0
    %184 = vmatprep.subr.bf16.mxu0 0
    %185 = vmatpush1.bf16.msra.mxu0 0
    %186 = vmatprep.mubr.bf16.mxu0 0
    %187 = vmatmul.mubr.bf16.gmra.mrb[0].mxu0 %v82
    %v188 = vpop.f32.mrb[0].mxu0
    %v189 = vadd.f32 %v104, %v188
    %v190 = vpop.f32.mrb[0].mxu0
    %v191 = vpop.f32.mrb[0].mxu0
    %v192 = vpop.f32.mrb[0].mxu0
    %193 = vdwg.mxu0
    %v194 = vpack.c.bf16 %v189, %v189
    %v195 = vld [vmem:[#allocation7] sm:$0xf]
    %v196 = vld [vmem:[#allocation7 + $0x4] sm:$0xf]
    %v197 = vld [vmem:[#allocation7 + $0x8] sm:$0xf]
    %v198 = vld [vmem:[#allocation7 + $0xc] sm:$0xf]
    %v199 = vld [vmem:[#allocation7 + $0x10] sm:$0xf]
    %v200 = vld [vmem:[#allocation7 + $0x14] sm:$0xf]
    %v201 = vld [vmem:[#allocation7 + $0x18] sm:$0xf]
    %v202 = vld [vmem:[#allocation7 + $0x1c] sm:$0xf]
    %v203 = vld [vmem:[#allocation7 + $0x20] sm:$0xf]
    %v204 = vld [vmem:[#allocation7 + $0x24] sm:$0xf]
    %v205 = vld [vmem:[#allocation7 + $0x28] sm:$0xf]
    %v206 = vld [vmem:[#allocation7 + $0x2c] sm:$0xf]
    %v207 = vld [vmem:[#allocation7 + $0x30] sm:$0xf]
    %v208 = vld [vmem:[#allocation7 + $0x34] sm:$0xf]
    %v209 = vld [vmem:[#allocation7 + $0x38] sm:$0xf]
    %v210 = vld [vmem:[#allocation7 + $0x3c] sm:$0xf]
    %v211 = vld [vmem:[%s4] sm:$0x1]
    %v213 = vlaneseq
    %v214 = vshrl.u32 %v213, 7
    %v215 = vsub.s32 0, %v214
    %v216 = vrot.slane %v211, %v215
    %v234 = vunpack.c.l.b16 %v195
    %v235 = vunpack.c.l.b16 %v196
    %v236 = vunpack.c.l.b16 %v197
    %v237 = vunpack.c.l.b16 %v198
    %v238 = vunpack.c.l.b16 %v199
    %v239 = vunpack.c.l.b16 %v200
    %v240 = vunpack.c.l.b16 %v201
    %v241 = vunpack.c.l.b16 %v202
    %v242 = vunpack.c.l.b16 %v203
    %v243 = vunpack.c.l.b16 %v204
    %v244 = vunpack.c.l.b16 %v205
    %v245 = vunpack.c.l.b16 %v206
    %v246 = vunpack.c.l.b16 %v207
    %v247 = vunpack.c.l.b16 %v208
    %v248 = vunpack.c.l.b16 %v209
    %v249 = vunpack.c.l.b16 %v210
    %v250 = vpack.c.b16 %v235, %v234
    %v251 = vpack.c.b16 %v237, %v236
    %v252 = vpack.c.b16 %v239, %v238
    %v253 = vpack.c.b16 %v241, %v240
    %v254 = vpack.c.b16 %v243, %v242
    %v255 = vpack.c.b16 %v245, %v244
    %v256 = vpack.c.b16 %v247, %v246
    %v257 = vpack.c.b16 %v249, %v248
    %266 = vmatprep.subr.bf16.mxu0 0
    %267 = vmatpush1.bf16.msra.mxu0 %v250
    %268 = vmatprep.subr.bf16.mxu0 0
    %269 = vmatpush1.bf16.msra.mxu0 %v251
    %270 = vmatprep.subr.bf16.mxu0 0
    %271 = vmatpush1.bf16.msra.mxu0 %v252
    %272 = vmatprep.subr.bf16.mxu0 0
    %273 = vmatpush1.bf16.msra.mxu0 %v253
    %274 = vmatprep.subr.bf16.mxu0 0
    %275 = vmatpush1.bf16.msra.mxu0 %v254
    %276 = vmatprep.subr.bf16.mxu0 0
    %277 = vmatpush1.bf16.msra.mxu0 %v255
    %278 = vmatprep.subr.bf16.mxu0 0
    %279 = vmatpush1.bf16.msra.mxu0 %v256
    %280 = vmatprep.subr.bf16.mxu0 0
    %281 = vmatpush1.bf16.msra.mxu0 %v257
    %282 = vmatprep.subr.bf16.mxu0 0
    %283 = vmatpush1.bf16.msra.mxu0 0
    %284 = vmatprep.subr.bf16.mxu0 0
    %285 = vmatpush1.bf16.msra.mxu0 0
    %286 = vmatprep.subr.bf16.mxu0 0
    %287 = vmatpush1.bf16.msra.mxu0 0
    %288 = vmatprep.subr.bf16.mxu0 0
    %289 = vmatpush1.bf16.msra.mxu0 0
    %290 = vmatprep.subr.bf16.mxu0 0
    %291 = vmatpush1.bf16.msra.mxu0 0
    %292 = vmatprep.subr.bf16.mxu0 0
    %293 = vmatpush1.bf16.msra.mxu0 0
    %294 = vmatprep.subr.bf16.mxu0 0
    %295 = vmatpush1.bf16.msra.mxu0 0
    %296 = vmatprep.subr.bf16.mxu0 0
    %297 = vmatpush1.bf16.msra.mxu0 0
    %298 = vmatprep.mubr.bf16.mxu0 0
    %299 = vmatmul.mubr.bf16.gmra.mrb[0].mxu0 %v194
    %v300 = vpop.f32.mrb[0].mxu0
    %v301 = vadd.f32 %v216, %v300
    %v302 = vpop.f32.mrb[0].mxu0
    %v303 = vpop.f32.mrb[0].mxu0
    %v304 = vpop.f32.mrb[0].mxu0
    %305 = vdwg.mxu0
    %v306 = vpack.c.bf16 %v301, %v301
    %v307 = vld [vmem:[#allocation8] sm:$0xf]
    %v308 = vld [vmem:[#allocation8 + $0x4] sm:$0xf]
    %v309 = vld [vmem:[#allocation8 + $0x8] sm:$0xf]
    %v310 = vld [vmem:[#allocation8 + $0xc] sm:$0xf]
    %v311 = vld [vmem:[#allocation8 + $0x10] sm:$0xf]
    %v312 = vld [vmem:[#allocation8 + $0x14] sm:$0xf]
    %v313 = vld [vmem:[#allocation8 + $0x18] sm:$0xf]
    %v314 = vld [vmem:[#allocation8 + $0x1c] sm:$0xf]
    %v315 = vld [vmem:[#allocation8 + $0x20] sm:$0xf]
    %v316 = vld [vmem:[#allocation8 + $0x24] sm:$0xf]
    %v317 = vld [vmem:[#allocation8 + $0x28] sm:$0xf]
    %v318 = vld [vmem:[#allocation8 + $0x2c] sm:$0xf]
    %v319 = vld [vmem:[#allocation8 + $0x30] sm:$0xf]
    %v320 = vld [vmem:[#allocation8 + $0x34] sm:$0xf]
    %v321 = vld [vmem:[#allocation8 + $0x38] sm:$0xf]
    %v322 = vld [vmem:[#allocation8 + $0x3c] sm:$0xf]
    %v323 = vld [vmem:[%s6] sm:$0x1]
    %v325 = vlaneseq
    %v326 = vshrl.u32 %v325, 7
    %v327 = vsub.s32 0, %v326
    %v328 = vrot.slane %v323, %v327
    %v346 = vunpack.c.l.b16 %v307
    %v347 = vunpack.c.l.b16 %v308
    %v348 = vunpack.c.l.b16 %v309
    %v349 = vunpack.c.l.b16 %v310
    %v350 = vunpack.c.l.b16 %v311
    %v351 = vunpack.c.l.b16 %v312
    %v352 = vunpack.c.l.b16 %v313
    %v353 = vunpack.c.l.b16 %v314
    %v354 = vunpack.c.l.b16 %v315
    %v355 = vunpack.c.l.b16 %v316
    %v356 = vunpack.c.l.b16 %v317
    %v357 = vunpack.c.l.b16 %v318
    %v358 = vunpack.c.l.b16 %v319
    %v359 = vunpack.c.l.b16 %v320
    %v360 = vunpack.c.l.b16 %v321
    %v361 = vunpack.c.l.b16 %v322
    %v362 = vpack.c.b16 %v347, %v346
    %v363 = vpack.c.b16 %v349, %v348
    %v364 = vpack.c.b16 %v351, %v350
    %v365 = vpack.c.b16 %v353, %v352
    %v366 = vpack.c.b16 %v355, %v354
    %v367 = vpack.c.b16 %v357, %v356
    %v368 = vpack.c.b16 %v359, %v358
    %v369 = vpack.c.b16 %v361, %v360
    %378 = vmatprep.subr.bf16.mxu0 0
    %379 = vmatpush1.bf16.msra.mxu0 %v362
    %380 = vmatprep.subr.bf16.mxu0 0
    %381 = vmatpush1.bf16.msra.mxu0 %v363
    %382 = vmatprep.subr.bf16.mxu0 0
    %383 = vmatpush1.bf16.msra.mxu0 %v364
    %384 = vmatprep.subr.bf16.mxu0 0
    %385 = vmatpush1.bf16.msra.mxu0 %v365
    %386 = vmatprep.subr.bf16.mxu0 0
    %387 = vmatpush1.bf16.msra.mxu0 %v366
    %388 = vmatprep.subr.bf16.mxu0 0
    %389 = vmatpush1.bf16.msra.mxu0 %v367
    %390 = vmatprep.subr.bf16.mxu0 0
    %391 = vmatpush1.bf16.msra.mxu0 %v368
    %392 = vmatprep.subr.bf16.mxu0 0
    %393 = vmatpush1.bf16.msra.mxu0 %v369
    %394 = vmatprep.subr.bf16.mxu0 0
    %395 = vmatpush1.bf16.msra.mxu0 0
    %396 = vmatprep.subr.bf16.mxu0 0
    %397 = vmatpush1.bf16.msra.mxu0 0
    %398 = vmatprep.subr.bf16.mxu0 0
    %399 = vmatpush1.bf16.msra.mxu0 0
    %400 = vmatprep.subr.bf16.mxu0 0
    %401 = vmatpush1.bf16.msra.mxu0 0
    %402 = vmatprep.subr.bf16.mxu0 0
    %403 = vmatpush1.bf16.msra.mxu0 0
    %404 = vmatprep.subr.bf16.mxu0 0
    %405 = vmatpush1.bf16.msra.mxu0 0
    %406 = vmatprep.subr.bf16.mxu0 0
    %407 = vmatpush1.bf16.msra.mxu0 0
    %408 = vmatprep.subr.bf16.mxu0 0
    %409 = vmatpush1.bf16.msra.mxu0 0
    %410 = vmatprep.mubr.bf16.mxu0 0
    %411 = vmatmul.mubr.bf16.gmra.mrb[0].mxu0 %v306
    %v412 = vpop.f32.mrb[0].mxu0
    %v413 = vadd.f32 %v328, %v412
    %v414 = vpop.f32.mrb[0].mxu0
    %v415 = vpop.f32.mrb[0].mxu0
    %v416 = vpop.f32.mrb[0].mxu0
    %417 = vdwg.mxu0
    %418 = vst [vmem:[#allocation10] sm:$0xff] %v413
    // Predicated region
    $region46: #{tpu_custom_call.1} parent=1 // pred_check
      _
    $region47: #{tpu_custom_call.1} parent=1 // pred_check_branch
      %420 = sbr.rel (0) target = $region49
    $region48: #{tpu_custom_call.1} parent=1 // pred_region
      %s422 = ssub.s32 128, 128
      %423 = vsyncadd [#allocation4], %s422
      %s425 = sshll.u32 [#allocation10], 4
      %s426 = int_to_ptr.vmem [resolvable:$true] %s425
      %428 = dma.vmem_to_hbm [thread:$0]  %s426, 128, %s7, [#allocation4]
    $region49: #{tpu_custom_call.1} parent=1 // pred_fallthru
      _
    // Predicated region
    $region50: #{tpu_custom_call.1} parent=1 // pred_check
      _
    $region51: #{tpu_custom_call.1} parent=1 // pred_check_branch
      %430 = sbr.rel (0) target = $region53
    $region52: #{tpu_custom_call.1} parent=1 // pred_region
      %431 = dma.done [#allocation4], 128
    $region53: #{tpu_custom_call.1} parent=1 // pred_fallthru
      _
    %432 = vsyncpa [#allocation3], 1
    %433 = vsyncpa [#allocation6], 1
    %434 = vsyncpa [#allocation9], 1
    %435 = vsyncpa [#allocation4], 1

// kernel: tpu_custom_call.1
$region0: #{tpu_custom_call.1}
  #allocation0 [shape = 'u32[]', space=smem, size = 0x4, offset = 0x4, fixed_abs, tag = 'smem constant byte address 0x4 - core index']
  #allocation1 [shape = 'u32[144,128]{1,0:T(1,128)}', space=vmem, size = 0x12000, scoped, tag = 'internal scratch']
  %s0 = inlined_call_operand.hbm [shape: f32[8,128], index: 0, kind: input, shape index: {}]
  %s1 = inlined_call_operand.hbm [shape: bf16[128,128], index: 1, kind: input, shape index: {}]
  %s2 = inlined_call_operand.vmem [shape: f32[1,128], index: 2, kind: input, shape index: {}]
  %s3 = inlined_call_operand.hbm [shape: bf16[128,128], index: 3, kind: input, shape index: {}]
  %s4 = inlined_call_operand.vmem [shape: f32[1,128], index: 4, kind: input, shape index: {}]
  %s5 = inlined_call_operand.hbm [shape: bf16[128,128], index: 5, kind: input, shape index: {}]
  %s6 = inlined_call_operand.vmem [shape: f32[1,128], index: 6, kind: input, shape index: {}]
  %s7 = inlined_call_operand.hbm [shape: f32[8,128], index: 7, kind: output, shape index: {}]
  %s8 = sld [smem:[#allocation0]]
  $region54: #{tpu_custom_call.1} parent=0
    _
  %s10 = ssub.s32 1, %s8
  %s11 = scalar_select 0, %s10, %s8
  $region1: #{tpu_custom_call.1} parent=0
    #allocation2 [shape = 'u8[4096]{0}', space=vmem, size = 0x1000, scoped, tag = 'input window, operand 0, single buffered']
    #allocation3 [shape = 's32[1]{0}', space=sflag, size = 0x4, scoped, tag = 'scoped memory for tpu_custom_call.1']
    #allocation4 [shape = 's32[1]{0}', space=sflag, size = 0x4, scoped, tag = 'scoped memory for tpu_custom_call.1']
    #allocation5 [shape = 'u8[32768]{0}', space=vmem, size = 0x8000, scoped, tag = 'input window, operand 1, single buffered']
    #allocation6 [shape = 's32[1]{0}', space=sflag, size = 0x4, scoped, tag = 'scoped memory for tpu_custom_call.1']
    #allocation7 [shape = 'u8[32768]{0}', space=vmem, size = 0x8000, scoped, tag = 'input window, operand 3, single buffered']
    #allocation8 [shape = 'u8[32768]{0}', space=vmem, size = 0x8000, scoped, tag = 'input window, operand 5, single buffered']
    #allocation9 [shape = 's32[1]{0}', space=sflag, size = 0x4, scoped, tag = 'scoped memory for tpu_custom_call.1']
    #allocation10 [shape = 'u8[4096]{0}', space=vmem, size = 0x1000, scoped, tag = 'output window, operand 0, single buffered']
    %12 = vsyncpa [#allocation3], 0
    %13 = vsyncpa [#allocation6], 0
    %14 = vsyncpa [#allocation9], 0
    %15 = vsyncpa [#allocation4], 0
    // Predicated region
    $region2: #{tpu_custom_call.1} parent=1 // pred_check
      _
    $region3: #{tpu_custom_call.1} parent=1 // pred_check_branch
      %17 = sbr.rel (0) target = $region5
    $region4: #{tpu_custom_call.1} parent=1 // pred_region
      %s19 = ssub.s32 128, 128
      %20 = vsyncadd [#allocation3], %s19
      %s22 = sshll.u32 [#allocation2], 4
      %s23 = int_to_ptr.vmem [resolvable:$true] %s22
      %25 = dma.hbm_to_vmem [thread:$0]  %s0, 128, %s23, [#allocation3]
    $region5: #{tpu_custom_call.1} parent=1 // pred_fallthru
      _
    // Predicated region
    $region6: #{tpu_custom_call.1} parent=1 // pred_check
      _
    $region7: #{tpu_custom_call.1} parent=1 // pred_check_branch
      %27 = sbr.rel (0) target = $region9
    $region8: #{tpu_custom_call.1} parent=1 // pred_region
      %s29 = ssub.s32 1024, 1024
      %30 = vsyncadd [#allocation6], %s29
      %s31 = sshll.u32 [#allocation5], 4
      %s32 = int_to_ptr.vmem [resolvable:$true] %s31
      %37 = dma.hbm_to_vmem [thread:$0]  %s1, 1024, %s32, [#allocation6], 64, 64, 4
    $region9: #{tpu_custom_call.1} parent=1 // pred_fallthru
      _
    // Predicated region
    $region10: #{tpu_custom_call.1} parent=1 // pred_check
      _
    $region11: #{tpu_custom_call.1} parent=1 // pred_check_branch
      %39 = sbr.rel (0) target = $region13
    $region12: #{tpu_custom_call.1} parent=1 // pred_region
      _
    $region13: #{tpu_custom_call.1} parent=1 // pred_fallthru
      _
    // Predicated region
    $region14: #{tpu_custom_call.1} parent=1 // pred_check
      _
    $region15: #{tpu_custom_call.1} parent=1 // pred_check_branch
      %41 = sbr.rel (0) target = $region17
    $region16: #{tpu_custom_call.1} parent=1 // pred_region
      %s43 = ssub.s32 1024, 1024
      %44 = vsyncadd [#allocation6], %s43
      %s45 = sshll.u32 [#allocation7], 4
      %s46 = int_to_ptr.vmem [resolvable:$true] %s45
      %51 = dma.hbm_to_vmem [thread:$0]  %s3, 1024, %s46, [#allocation6], 64, 64, 4
    $region17: #{tpu_custom_call.1} parent=1 // pred_fallthru
      _
    // Predicated region
    $region18: #{tpu_custom_call.1} parent=1 // pred_check
      _
    $region19: #{tpu_custom_call.1} parent=1 // pred_check_branch
      %53 = sbr.rel (0) target = $region21
    $region20: #{tpu_custom_call.1} parent=1 // pred_region
      _
    $region21: #{tpu_custom_call.1} parent=1 // pred_fallthru
      _
    // Predicated region
    $region22: #{tpu_custom_call.1} parent=1 // pred_check
      _
    $region23: #{tpu_custom_call.1} parent=1 // pred_check_branch
      %55 = sbr.rel (0) target = $region25
    $region24: #{tpu_custom_call.1} parent=1 // pred_region
      %s57 = ssub.s32 1024, 1024
      %58 = vsyncadd [#allocation9], %s57
      %s59 = sshll.u32 [#allocation8], 4
      %s60 = int_to_ptr.vmem [resolvable:$true] %s59
      %65 = dma.hbm_to_vmem [thread:$0]  %s5, 1024, %s60, [#allocation9], 64, 64, 4
    $region25: #{tpu_custom_call.1} parent=1 // pred_fallthru
      _
    // Predicated region
    $region26: #{tpu_custom_call.1} parent=1 // pred_check
      _
    $region27: #{tpu_custom_call.1} parent=1 // pred_check_branch
      %67 = sbr.rel (0) target = $region29
    $region28: #{tpu_custom_call.1} parent=1 // pred_region
      _
    $region29: #{tpu_custom_call.1} parent=1 // pred_fallthru
      _
    // Predicated region
    $region30: #{tpu_custom_call.1} parent=1 // pred_check
      _
    $region31: #{tpu_custom_call.1} parent=1 // pred_check_branch
      %69 = sbr.rel (0) target = $region33
    $region32: #{tpu_custom_call.1} parent=1 // pred_region
      %70 = dma.done [#allocation3], 128
    $region33: #{tpu_custom_call.1} parent=1 // pred_fallthru
      _
    // Predicated region
    $region34: #{tpu_custom_call.1} parent=1 // pred_check
      _
    $region35: #{tpu_custom_call.1} parent=1 // pred_check_branch
      %72 = sbr.rel (0) target = $region37
    $region36: #{tpu_custom_call.1} parent=1 // pred_region
      %73 = dma.done [#allocation6], 1024
    $region37: #{tpu_custom_call.1} parent=1 // pred_fallthru
      _
    // Predicated region
    $region38: #{tpu_custom_call.1} parent=1 // pred_check
      _
    $region39: #{tpu_custom_call.1} parent=1 // pred_check_branch
      %75 = sbr.rel (0) target = $region41
    $region40: #{tpu_custom_call.1} parent=1 // pred_region
      %76 = dma.done [#allocation6], 1024
    $region41: #{tpu_custom_call.1} parent=1 // pred_fallthru
      _
    // Predicated region
    $region42: #{tpu_custom_call.1} parent=1 // pred_check
      _
    $region43: #{tpu_custom_call.1} parent=1 // pred_check_branch
      %78 = sbr.rel (0) target = $region45
    $region44: #{tpu_custom_call.1} parent=1 // pred_region
      %79 = dma.done [#allocation9], 1024
    $region45: #{tpu_custom_call.1} parent=1 // pred_fallthru
      _
    %v81 = vld [vmem:[#allocation2] sm:$0xff]
    %v82 = vpack.c.bf16 %v81, %v81
    %v83 = vld [vmem:[#allocation5] sm:$0xf]
    %v84 = vld [vmem:[#allocation5 + $0x4] sm:$0xf]
    %v85 = vld [vmem:[#allocation5 + $0x8] sm:$0xf]
    %v86 = vld [vmem:[#allocation5 + $0xc] sm:$0xf]
    %v87 = vld [vmem:[#allocation5 + $0x10] sm:$0xf]
    %v88 = vld [vmem:[#allocation5 + $0x14] sm:$0xf]
    %v89 = vld [vmem:[#allocation5 + $0x18] sm:$0xf]
    %v90 = vld [vmem:[#allocation5 + $0x1c] sm:$0xf]
    %v91 = vld [vmem:[#allocation5 + $0x20] sm:$0xf]
    %v92 = vld [vmem:[#allocation5 + $0x24] sm:$0xf]
    %v93 = vld [vmem:[#allocation5 + $0x28] sm:$0xf]
    %v94 = vld [vmem:[#allocation5 + $0x2c] sm:$0xf]
    %v95 = vld [vmem:[#allocation5 + $0x30] sm:$0xf]
    %v96 = vld [vmem:[#allocation5 + $0x34] sm:$0xf]
    %v97 = vld [vmem:[#allocation5 + $0x38] sm:$0xf]
    %v98 = vld [vmem:[#allocation5 + $0x3c] sm:$0xf]
    %v99 = vld [vmem:[%s2] sm:$0x1]
    %v101 = vlaneseq
    %v102 = vshrl.u32 %v101, 7
    %v103 = vsub.s32 0, %v102
    %v104 = vrot.slane %v99, %v103
    %v122 = vunpack.c.l.b16 %v83
    %v123 = vunpack.c.l.b16 %v84
    %v124 = vunpack.c.l.b16 %v85
    %v125 = vunpack.c.l.b16 %v86
    %v126 = vunpack.c.l.b16 %v87
    %v127 = vunpack.c.l.b16 %v88
    %v128 = vunpack.c.l.b16 %v89
    %v129 = vunpack.c.l.b16 %v90
    %v130 = vunpack.c.l.b16 %v91
    %v131 = vunpack.c.l.b16 %v92
    %v132 = vunpack.c.l.b16 %v93
    %v133 = vunpack.c.l.b16 %v94
    %v134 = vunpack.c.l.b16 %v95
    %v135 = vunpack.c.l.b16 %v96
    %v136 = vunpack.c.l.b16 %v97
    %v137 = vunpack.c.l.b16 %v98
    %v138 = vpack.c.b16 %v123, %v122
    %v139 = vpack.c.b16 %v125, %v124
    %v140 = vpack.c.b16 %v127, %v126
    %v141 = vpack.c.b16 %v129, %v128
    %v142 = vpack.c.b16 %v131, %v130
    %v143 = vpack.c.b16 %v133, %v132
    %v144 = vpack.c.b16 %v135, %v134
    %v145 = vpack.c.b16 %v137, %v136
    %154 = vmatprep.subr.bf16.mxu0 0
    %155 = vmatpush1.bf16.msra.mxu0 %v138
    %156 = vmatprep.subr.bf16.mxu0 0
    %157 = vmatpush1.bf16.msra.mxu0 %v139
    %158 = vmatprep.subr.bf16.mxu0 0
    %159 = vmatpush1.bf16.msra.mxu0 %v140
    %160 = vmatprep.subr.bf16.mxu0 0
    %161 = vmatpush1.bf16.msra.mxu0 %v141
    %162 = vmatprep.subr.bf16.mxu0 0
    %163 = vmatpush1.bf16.msra.mxu0 %v142
    %164 = vmatprep.subr.bf16.mxu0 0
    %165 = vmatpush1.bf16.msra.mxu0 %v143
    %166 = vmatprep.subr.bf16.mxu0 0
    %167 = vmatpush1.bf16.msra.mxu0 %v144
    %168 = vmatprep.subr.bf16.mxu0 0
    %169 = vmatpush1.bf16.msra.mxu0 %v145
    %170 = vmatprep.subr.bf16.mxu0 0
    %171 = vmatpush1.bf16.msra.mxu0 0
    %172 = vmatprep.subr.bf16.mxu0 0
    %173 = vmatpush1.bf16.msra.mxu0 0
    %174 = vmatprep.subr.bf16.mxu0 0
    %175 = vmatpush1.bf16.msra.mxu0 0
    %176 = vmatprep.subr.bf16.mxu0 0
    %177 = vmatpush1.bf16.msra.mxu0 0
    %178 = vmatprep.subr.bf16.mxu0 0
    %179 = vmatpush1.bf16.msra.mxu0 0
    %180 = vmatprep.subr.bf16.mxu0 0
    %181 = vmatpush1.bf16.msra.mxu0 0
    %182 = vmatprep.subr.bf16.mxu0 0
    %183 = vmatpush1.bf16.msra.mxu0 0
    %184 = vmatprep.subr.bf16.mxu0 0
    %185 = vmatpush1.bf16.msra.mxu0 0
    %186 = vmatprep.mubr.bf16.mxu0 0
    %187 = vmatmul.mubr.bf16.gmra.mrb[0].mxu0 %v82
    %v188 = vpop.f32.mrb[0].mxu0
    %v189 = vadd.f32 %v104, %v188
    %v190 = vpop.f32.mrb[0].mxu0
    %v191 = vpop.f32.mrb[0].mxu0
    %v192 = vpop.f32.mrb[0].mxu0
    %193 = vdwg.mxu0
    %v194 = vpack.c.bf16 %v189, %v189
    %v195 = vld [vmem:[#allocation7] sm:$0xf]
    %v196 = vld [vmem:[#allocation7 + $0x4] sm:$0xf]
    %v197 = vld [vmem:[#allocation7 + $0x8] sm:$0xf]
    %v198 = vld [vmem:[#allocation7 + $0xc] sm:$0xf]
    %v199 = vld [vmem:[#allocation7 + $0x10] sm:$0xf]
    %v200 = vld [vmem:[#allocation7 + $0x14] sm:$0xf]
    %v201 = vld [vmem:[#allocation7 + $0x18] sm:$0xf]
    %v202 = vld [vmem:[#allocation7 + $0x1c] sm:$0xf]
    %v203 = vld [vmem:[#allocation7 + $0x20] sm:$0xf]
    %v204 = vld [vmem:[#allocation7 + $0x24] sm:$0xf]
    %v205 = vld [vmem:[#allocation7 + $0x28] sm:$0xf]
    %v206 = vld [vmem:[#allocation7 + $0x2c] sm:$0xf]
    %v207 = vld [vmem:[#allocation7 + $0x30] sm:$0xf]
    %v208 = vld [vmem:[#allocation7 + $0x34] sm:$0xf]
    %v209 = vld [vmem:[#allocation7 + $0x38] sm:$0xf]
    %v210 = vld [vmem:[#allocation7 + $0x3c] sm:$0xf]
    %v211 = vld [vmem:[%s4] sm:$0x1]
    %v213 = vlaneseq
    %v214 = vshrl.u32 %v213, 7
    %v215 = vsub.s32 0, %v214
    %v216 = vrot.slane %v211, %v215
    %v234 = vunpack.c.l.b16 %v195
    %v235 = vunpack.c.l.b16 %v196
    %v236 = vunpack.c.l.b16 %v197
    %v237 = vunpack.c.l.b16 %v198
    %v238 = vunpack.c.l.b16 %v199
    %v239 = vunpack.c.l.b16 %v200
    %v240 = vunpack.c.l.b16 %v201
    %v241 = vunpack.c.l.b16 %v202
    %v242 = vunpack.c.l.b16 %v203
    %v243 = vunpack.c.l.b16 %v204
    %v244 = vunpack.c.l.b16 %v205
    %v245 = vunpack.c.l.b16 %v206
    %v246 = vunpack.c.l.b16 %v207
    %v247 = vunpack.c.l.b16 %v208
    %v248 = vunpack.c.l.b16 %v209
    %v249 = vunpack.c.l.b16 %v210
    %v250 = vpack.c.b16 %v235, %v234
    %v251 = vpack.c.b16 %v237, %v236
    %v252 = vpack.c.b16 %v239, %v238
    %v253 = vpack.c.b16 %v241, %v240
    %v254 = vpack.c.b16 %v243, %v242
    %v255 = vpack.c.b16 %v245, %v244
    %v256 = vpack.c.b16 %v247, %v246
    %v257 = vpack.c.b16 %v249, %v248
    %266 = vmatprep.subr.bf16.mxu0 0
    %267 = vmatpush1.bf16.msra.mxu0 %v250
    %268 = vmatprep.subr.bf16.mxu0 0
    %269 = vmatpush1.bf16.msra.mxu0 %v251
    %270 = vmatprep.subr.bf16.mxu0 0
    %271 = vmatpush1.bf16.msra.mxu0 %v252
    %272 = vmatprep.subr.bf16.mxu0 0
    %273 = vmatpush1.bf16.msra.mxu0 %v253
    %274 = vmatprep.subr.bf16.mxu0 0
    %275 = vmatpush1.bf16.msra.mxu0 %v254
    %276 = vmatprep.subr.bf16.mxu0 0
    %277 = vmatpush1.bf16.msra.mxu0 %v255
    %278 = vmatprep.subr.bf16.mxu0 0
    %279 = vmatpush1.bf16.msra.mxu0 %v256
    %280 = vmatprep.subr.bf16.mxu0 0
    %281 = vmatpush1.bf16.msra.mxu0 %v257
    %282 = vmatprep.subr.bf16.mxu0 0
    %283 = vmatpush1.bf16.msra.mxu0 0
    %284 = vmatprep.subr.bf16.mxu0 0
    %285 = vmatpush1.bf16.msra.mxu0 0
    %286 = vmatprep.subr.bf16.mxu0 0
    %287 = vmatpush1.bf16.msra.mxu0 0
    %288 = vmatprep.subr.bf16.mxu0 0
    %289 = vmatpush1.bf16.msra.mxu0 0
    %290 = vmatprep.subr.bf16.mxu0 0
    %291 = vmatpush1.bf16.msra.mxu0 0
    %292 = vmatprep.subr.bf16.mxu0 0
    %293 = vmatpush1.bf16.msra.mxu0 0
    %294 = vmatprep.subr.bf16.mxu0 0
    %295 = vmatpush1.bf16.msra.mxu0 0
    %296 = vmatprep.subr.bf16.mxu0 0
    %297 = vmatpush1.bf16.msra.mxu0 0
    %298 = vmatprep.mubr.bf16.mxu0 0
    %299 = vmatmul.mubr.bf16.gmra.mrb[0].mxu0 %v194
    %v300 = vpop.f32.mrb[0].mxu0
    %v301 = vadd.f32 %v216, %v300
    %v302 = vpop.f32.mrb[0].mxu0
    %v303 = vpop.f32.mrb[0].mxu0
    %v304 = vpop.f32.mrb[0].mxu0
    %305 = vdwg.mxu0
    %v306 = vpack.c.bf16 %v301, %v301
    %v307 = vld [vmem:[#allocation8] sm:$0xf]
    %v308 = vld [vmem:[#allocation8 + $0x4] sm:$0xf]
    %v309 = vld [vmem:[#allocation8 + $0x8] sm:$0xf]
    %v310 = vld [vmem:[#allocation8 + $0xc] sm:$0xf]
    %v311 = vld [vmem:[#allocation8 + $0x10] sm:$0xf]
    %v312 = vld [vmem:[#allocation8 + $0x14] sm:$0xf]
    %v313 = vld [vmem:[#allocation8 + $0x18] sm:$0xf]
    %v314 = vld [vmem:[#allocation8 + $0x1c] sm:$0xf]
    %v315 = vld [vmem:[#allocation8 + $0x20] sm:$0xf]
    %v316 = vld [vmem:[#allocation8 + $0x24] sm:$0xf]
    %v317 = vld [vmem:[#allocation8 + $0x28] sm:$0xf]
    %v318 = vld [vmem:[#allocation8 + $0x2c] sm:$0xf]
    %v319 = vld [vmem:[#allocation8 + $0x30] sm:$0xf]
    %v320 = vld [vmem:[#allocation8 + $0x34] sm:$0xf]
    %v321 = vld [vmem:[#allocation8 + $0x38] sm:$0xf]
    %v322 = vld [vmem:[#allocation8 + $0x3c] sm:$0xf]
    %v323 = vld [vmem:[%s6] sm:$0x1]
    %v325 = vlaneseq
    %v326 = vshrl.u32 %v325, 7
    %v327 = vsub.s32 0, %v326
    %v328 = vrot.slane %v323, %v327
    %v346 = vunpack.c.l.b16 %v307
    %v347 = vunpack.c.l.b16 %v308
    %v348 = vunpack.c.l.b16 %v309
    %v349 = vunpack.c.l.b16 %v310
    %v350 = vunpack.c.l.b16 %v311
    %v351 = vunpack.c.l.b16 %v312
    %v352 = vunpack.c.l.b16 %v313
    %v353 = vunpack.c.l.b16 %v314
    %v354 = vunpack.c.l.b16 %v315
    %v355 = vunpack.c.l.b16 %v316
    %v356 = vunpack.c.l.b16 %v317
    %v357 = vunpack.c.l.b16 %v318
    %v358 = vunpack.c.l.b16 %v319
    %v359 = vunpack.c.l.b16 %v320
    %v360 = vunpack.c.l.b16 %v321
    %v361 = vunpack.c.l.b16 %v322
    %v362 = vpack.c.b16 %v347, %v346
    %v363 = vpack.c.b16 %v349, %v348
    %v364 = vpack.c.b16 %v351, %v350
    %v365 = vpack.c.b16 %v353, %v352
    %v366 = vpack.c.b16 %v355, %v354
    %v367 = vpack.c.b16 %v357, %v356
    %v368 = vpack.c.b16 %v359, %v358
    %v369 = vpack.c.b16 %v361, %v360
    %378 = vmatprep.subr.bf16.mxu0 0
    %379 = vmatpush1.bf16.msra.mxu0 %v362
    %380 = vmatprep.subr.bf16.mxu0 0
    %381 = vmatpush1.bf16.msra.mxu0 %v363
    %382 = vmatprep.subr.bf16.mxu0 0
    %383 = vmatpush1.bf16.msra.mxu0 %v364
    %384 = vmatprep.subr.bf16.mxu0 0
    %385 = vmatpush1.bf16.msra.mxu0 %v365
    %386 = vmatprep.subr.bf16.mxu0 0
    %387 = vmatpush1.bf16.msra.mxu0 %v366
    %388 = vmatprep.subr.bf16.mxu0 0
    %389 = vmatpush1.bf16.msra.mxu0 %v367
    %390 = vmatprep.subr.bf16.mxu0 0
    %391 = vmatpush1.bf16.msra.mxu0 %v368
    %392 = vmatprep.subr.bf16.mxu0 0
    %393 = vmatpush1.bf16.msra.mxu0 %v369
    %394 = vmatprep.subr.bf16.mxu0 0
    %395 = vmatpush1.bf16.msra.mxu0 0
    %396 = vmatprep.subr.bf16.mxu0 0
    %397 = vmatpush1.bf16.msra.mxu0 0
    %398 = vmatprep.subr.bf16.mxu0 0
    %399 = vmatpush1.bf16.msra.mxu0 0
    %400 = vmatprep.subr.bf16.mxu0 0
    %401 = vmatpush1.bf16.msra.mxu0 0
    %402 = vmatprep.subr.bf16.mxu0 0
    %403 = vmatpush1.bf16.msra.mxu0 0
    %404 = vmatprep.subr.bf16.mxu0 0
    %405 = vmatpush1.bf16.msra.mxu0 0
    %406 = vmatprep.subr.bf16.mxu0 0
    %407 = vmatpush1.bf16.msra.mxu0 0
    %408 = vmatprep.subr.bf16.mxu0 0
    %409 = vmatpush1.bf16.msra.mxu0 0
    %410 = vmatprep.mubr.bf16.mxu0 0
    %411 = vmatmul.mubr.bf16.gmra.mrb[0].mxu0 %v306
    %v412 = vpop.f32.mrb[0].mxu0
    %v413 = vadd.f32 %v328, %v412
    %v414 = vpop.f32.mrb[0].mxu0
    %v415 = vpop.f32.mrb[0].mxu0
    %v416 = vpop.f32.mrb[0].mxu0
    %417 = vdwg.mxu0
    %418 = vst [vmem:[#allocation10] sm:$0xff] %v413
    // Predicated region
    $region46: #{tpu_custom_call.1} parent=1 // pred_check
      _
    $region47: #{tpu_custom_call.1} parent=1 // pred_check_branch
      %420 = sbr.rel (0) target = $region49
    $region48: #{tpu_custom_call.1} parent=1 // pred_region
      %s422 = ssub.s32 128, 128
      %423 = vsyncadd [#allocation4], %s422
      %s425 = sshll.u32 [#allocation10], 4
      %s426 = int_to_ptr.vmem [resolvable:$true] %s425
      %428 = dma.vmem_to_hbm [thread:$0]  %s426, 128, %s7, [#allocation4]
    $region49: #{tpu_custom_call.1} parent=1 // pred_fallthru
      _
    // Predicated region
    $region50: #{tpu_custom_call.1} parent=1 // pred_check
      _
    $region51: #{tpu_custom_call.1} parent=1 // pred_check_branch
      %430 = sbr.rel (0) target = $region53
    $region52: #{tpu_custom_call.1} parent=1 // pred_region
      %431 = dma.done [#allocation4], 128
    $region53: #{tpu_custom_call.1} parent=1 // pred_fallthru
      _
    %432 = vsyncpa [#allocation3], 1
    %433 = vsyncpa [#allocation6], 1
    %434 = vsyncpa [#allocation9], 1
    %435 = vsyncpa [#allocation4], 1

</llo_original>
